<compile_context>
chip_gen: v6e
topology: v6e:2x2x1
jax: 0.10.0
libtpu: 0.0.40
codegen_flags: <defaults>
</compile_context>

<pallas_src>
import numpy as np
import jax
import jax.numpy as jnp
from jax.experimental import pallas as pl
from jax.experimental.pallas import tpu as pltpu

# ----------------------- small, module-consistent config ----------------------
D_MODEL = 32
MAX_TEMP_DIST = 4          # temp_range     = 2*4 + 1 = 9
MAX_DISTANCE_DIST = 5      # distance_range = 2*5 + 1 = 11
MAX_SIZE_DIST = 5          # size_range     = 2*5 + 1 = 11
RANGE_FACTOR_T = 2.0       # temporal range_factor in _get_temporal_ids
RANGE_FACTOR_S = 15.0      # spatial range_factor in _get_spatial_ids

R1 = 2 * MAX_DISTANCE_DIST + 1   # 11 distance buckets
R2 = 2 * MAX_SIZE_DIST + 1       # 11 size buckets
R3 = 2 * MAX_TEMP_DIST + 1       # 9 temporal buckets

LANES = 128
K_SEG = 32                        # per-token segment of the packed contraction axis
TOK_PER_ROW = LANES // D_MODEL    # 4 tokens per 128-lane output row
ROW_BLOCK_MAX = 512               # rows per grid step when the problem is large
assert LANES % D_MODEL == 0
assert R1 + R2 + R3 <= K_SEG, "axis tables must fit one 32-wide segment"


# ------------------- deterministic parameter setup (glue) ---------------------
def _axis_embeddings(d_model, r1, r2, r3):
    """Per-axis sin/cos tables of PositionalEncoding3D(channels=d_model), each rounded
    through fp16 (matches the module casting the full pe to fp16 — the cast is
    elementwise and pe is a pure per-channel copy of ex/ey/ez)."""
    ch = int(np.ceil(d_model / 6) * 2)
    if ch % 2:
        ch += 1
    inv_freq = 1.0 / (10000.0 ** (np.arange(0, ch, 2, dtype=np.float32) / np.float32(ch)))

    def axis_emb(n):
        pos = np.arange(n, dtype=np.float32)
        sin_inp = np.einsum("i,j->ij", pos, inv_freq)                # (n, ch/2)
        emb = np.stack([np.sin(sin_inp), np.cos(sin_inp)], axis=-1)  # (n, ch/2, 2)
        return emb.reshape(n, -1)                                    # (n, ch) interleaved

    ex = axis_emb(r1).astype(np.float16).astype(np.float32)
    ey = axis_emb(r2).astype(np.float16).astype(np.float32)
    ez = axis_emb(r3).astype(np.float16).astype(np.float32)
    return ex, ey, ez, ch


def build_pe_table(d_model, r1, r2, r3):
    """Full 4-D table (reference only): pe[i,j,k,:] = concat(ex[i], ey[j], ez[k])[:d]."""
    ex, ey, ez, ch = _axis_embeddings(d_model, r1, r2, r3)
    pe = np.zeros((r1, r2, r3, 3 * ch), dtype=np.float32)
    pe[..., :ch] = ex[:, None, None, :]
    pe[..., ch:2 * ch] = ey[None, :, None, :]
    pe[..., 2 * ch:] = ez[None, None, :, :]
    return jnp.asarray(pe[..., :d_model])


def build_packed_axes_table(d_model):
    """Block-diagonal gather table (128, 128):
       rows [32j, 32j+32) x lanes [32j, 32j+32) hold the (K_SEG, D) axes table, whose
       rows 0..R1-1 are ex (channels 0:ch), R1..R1+R2-1 are ey (channels ch:2ch),
       R1+R2..R1+R2+R3-1 are ez (channels 2ch:D)."""
    ex, ey, ez, ch = _axis_embeddings(d_model, R1, R2, R3)
    assert 2 * ch < d_model <= 3 * ch
    axes = np.zeros((K_SEG, d_model), dtype=np.float32)
    axes[0:R1, 0:ch] = ex
    axes[R1:R1 + R2, ch:2 * ch] = ey
    axes[R1 + R2:R1 + R2 + R3, 2 * ch:d_model] = ez[:, : d_model - 2 * ch]
    packed = np.zeros((TOK_PER_ROW * K_SEG, LANES), dtype=np.float32)   # (128, 128)
    for j in range(TOK_PER_ROW):
        packed[j * K_SEG:(j + 1) * K_SEG, j * d_model:(j + 1) * d_model] = axes
    return jnp.asarray(packed)


def insert_fake_bboxes(mem_bboxes, can_bboxes):
    """_insert_fake_bboxes for MEM-SEP-CAN with encode_sep_as_ref=True (pure concat glue)."""
    ref_bbox = mem_bboxes[:, -1:, :]
    parts = []
    for i in range(can_bboxes.shape[1]):
        parts += [ref_bbox, can_bboxes[:, i:i + 1, :]]
    parts += [ref_bbox, ref_bbox]          # [ZERO] tokens
    return jnp.concatenate(parts, axis=1)  # (B, Lc, 4)


# ------------------------------- Pallas kernel --------------------------------
def _pe_kernel(x_ref, idx_ref, table_ref, out_ref):
    """x_ref:   (rows, 128) f32 packed activations (4 tokens x 32 channels per row)
       idx_ref: (rows, 128) i32 per-token bitfield (xy | (R1+sz)<<6 | (R1+R2+t)<<12),
                replicated across each token's 32 lanes
       table:   (128, 128)  f32 block-diagonal axes table
       out:     (rows, 128) f32 = x + PE (aligned full-tile store)."""
    rows, lanes = x_ref.shape
    cols = jax.lax.broadcasted_iota(jnp.int32, (rows, lanes), 1)
    local = cols & (K_SEG - 1)                  # lane index within the 32-wide segment
    p = idx_ref[...]
    ia = p & 63                                 # distance row     [0, R1)
    ib = (p >> 6) & 63                          # size row         [R1, R1+R2)
    ic = (p >> 12) & 63                         # temporal row     [R1+R2, R1+R2+R3)
    hit = (local == ia) | (local == ib) | (local == ic)
    onehot = hit.astype(jnp.float32)            # exact 0/1 selection
    enc = jnp.dot(onehot, table_ref[...], preferred_element_type=jnp.float32)
    out_ref[...] = x_ref[...] + enc


def positional_encoding_forward(mem, can, mem_bboxes, can_bboxes, num_candidates,
                                table_packed):
    B, Lm, D = mem.shape
    Lc = can.shape[1]
    assert D == D_MODEL
    assert Lc == (can_bboxes.shape[1] + 1) * 2, "wrong number of candidate tokens"
    assert can_bboxes.shape[1] == num_candidates - 1, "wrong number of candidate bboxes"
    assert Lc % num_candidates == 0
    L = Lm + Lc
    N = B * L

    # ---- bbox plumbing (concat glue, identical to the module) ----
    can_bb_full = insert_fake_bboxes(mem_bboxes, can_bboxes)        # (B, Lc, 4)
    all_bb = jnp.concatenate([mem_bboxes, can_bb_full], axis=1)     # (B, L, 4)
    ref_bb = mem_bboxes[:, -1:, :]                                  # (B, 1, 4)

    # ---- spatial bucket indices (tiny elementwise work -> wrapper) ----
    xmin_r, ymin_r, xmax_r, ymax_r = [ref_bb[..., k] for k in range(4)]
    w_r = xmax_r - xmin_r + 1.0
    h_r = ymax_r - ymin_r + 1.0
    cx_r = 0.5 * (xmin_r + xmax_r)
    cy_r = 0.5 * (ymin_r + ymax_r)
    xmin, ymin, xmax, ymax = [all_bb[..., k] for k in range(4)]
    w = xmax - xmin + 1.0
    h = ymax - ymin + 1.0
    cx = 0.5 * (xmin + xmax)
    cy = 0.5 * (ymin + ymax)
    dx = (cx - cx_r) / w
    dy = (cy - cy_r) / h
    xy = jnp.log(jnp.sqrt(dx * dx + dy * dy) + 0.001)
    sz = jnp.log(w / w_r + 0.001) + jnp.log(h / h_r + 0.001)
    xy_i = jnp.clip(xy * RANGE_FACTOR_S, -MAX_DISTANCE_DIST,
                    MAX_DISTANCE_DIST).astype(jnp.int32) + MAX_DISTANCE_DIST   # (B, L)
    sz_i = jnp.clip(sz * RANGE_FACTOR_S, -MAX_SIZE_DIST,
                    MAX_SIZE_DIST).astype(jnp.int32) + MAX_SIZE_DIST           # (B, L)

    # ---- temporal bucket indices: position-only -> numpy at trace time ----
    epc = Lc // num_candidates
    mem_t = np.clip(np.arange(-Lm + 1, 1, dtype=np.float32) * RANGE_FACTOR_T,
                    -MAX_TEMP_DIST, MAX_TEMP_DIST).astype(np.int32) + MAX_TEMP_DIST
    can_t = np.clip(np.tile(np.arange(1, 1 + epc, dtype=np.float32), num_candidates)
                    * RANGE_FACTOR_T,
                    -MAX_TEMP_DIST, MAX_TEMP_DIST).astype(np.int32) + MAX_TEMP_DIST
    t_idx = np.concatenate([mem_t, can_t])                                     # (L,)
    t_i = jnp.broadcast_to(jnp.asarray(t_idx, jnp.int32)[None, :], (B, L))     # (B, L)

    # ---- single int32 bitfield per token (segment-local row targets) ----
    packed_idx = (xy_i.astype(jnp.int32)
                  | ((R1 + sz_i).astype(jnp.int32) << 6)
                  | ((R1 + R2 + t_i).astype(jnp.int32) << 12))                 # (B, L)

    # ---- lane-dense packing: 4 tokens per 128-lane row, row-block tiling ----
    tok_per_row = LANES // D
    rows_needed = (N + tok_per_row - 1) // tok_per_row
    rows8 = ((rows_needed + 7) // 8) * 8
    row_block = rows8 if rows8 <= ROW_BLOCK_MAX else ROW_BLOCK_MAX
    rows_pad = ((rows8 + row_block - 1) // row_block) * row_block
    n_pad = rows_pad * tok_per_row
    grid = rows_pad // row_block

    x = jnp.concatenate([mem, can], axis=1).reshape(N, D)
    x = jnp.pad(x, ((0, n_pad - N), (0, 0))).reshape(rows_pad, LANES)

    idx_flat = jnp.pad(packed_idx.reshape(N), (0, n_pad - N))
    idx = jnp.repeat(idx_flat.reshape(rows_pad, tok_per_row),
                     LANES // tok_per_row, axis=1)                  # (rows_pad, 128)

    out_packed = pl.pallas_call(
        _pe_kernel,
        out_shape=jax.ShapeDtypeStruct((rows_pad, LANES), jnp.float32),
        grid_spec=pltpu.PrefetchScalarGridSpec(
            num_scalar_prefetch=0,
            grid=(grid,),
            in_specs=[pl.BlockSpec((row_block, LANES), lambda i: (i, 0)),
                      pl.BlockSpec((row_block, LANES), lambda i: (i, 0)),
                      pl.BlockSpec((LANES, LANES), lambda i: (0, 0))],
            out_specs=pl.BlockSpec((row_block, LANES), lambda i: (i, 0)),
        ),
        compiler_params=pltpu.CompilerParams(dimension_semantics=("parallel",)),
    )(x, idx, table_packed)

    out = out_packed.reshape(n_pad, D)[:N].reshape(B, L, D)
    # dropout(p=0.1): identity in eval mode
    return out


# --------------------------- pure-JAX reference -------------------------------
def reference_forward(mem, can, mem_bboxes, can_bboxes, num_candidates, pe4):
    B, Lm, D = mem.shape
    Lc = can.shape[1]
    ref_bbox = mem_bboxes[:, -1:, :]
    can_bb = insert_fake_bboxes(mem_bboxes, can_bboxes)

    def dist(bb, rb):
        xmin_r, ymin_r, xmax_r, ymax_r = [rb[..., k:k + 1] for k in range(4)]
        w_r = xmax_r - xmin_r + 1.0
        h_r = ymax_r - ymin_r + 1.0
        cx_r = 0.5 * (xmin_r + xmax_r)
        cy_r = 0.5 * (ymin_r + ymax_r)
        xmin, ymin, xmax, ymax = [bb[..., k:k + 1] for k in range(4)]
        w = xmax - xmin + 1.0
        h = ymax - ymin + 1.0
        cx = 0.5 * (xmin + xmax)
        cy = 0.5 * (ymin + ymax)
        dx = (cx - cx_r) / w
        dy = (cy - cy_r) / h
        xy = jnp.log(jnp.sqrt(dx * dx + dy * dy) + 0.001)
        sz = jnp.log(w / w_r + 0.001) + jnp.log(h / h_r + 0.001)
        return xy[..., 0], sz[..., 0]

    def spatial_idx(xy, sz):
        xy_i = jnp.clip(xy * RANGE_FACTOR_S, -MAX_DISTANCE_DIST,
                        MAX_DISTANCE_DIST).astype(jnp.int32) + MAX_DISTANCE_DIST
        sz_i = jnp.clip(sz * RANGE_FACTOR_S, -MAX_SIZE_DIST,
                        MAX_SIZE_DIST).astype(jnp.int32) + MAX_SIZE_DIST
        return xy_i, sz_i

    mem_xy_i, mem_sz_i = spatial_idx(*dist(mem_bboxes, ref_bbox))
    can_xy_i, can_sz_i = spatial_idx(*dist(can_bb, ref_bbox))

    mem_t = np.clip(np.arange(-Lm + 1, 1) * RANGE_FACTOR_T, -MAX_TEMP_DIST,
                    MAX_TEMP_DIST).astype(np.int32) + MAX_TEMP_DIST
    epc = Lc // num_candidates
    can_t = np.clip(np.tile(np.arange(1, 1 + epc), num_candidates) * RANGE_FACTOR_T,
                    -MAX_TEMP_DIST, MAX_TEMP_DIST).astype(np.int32) + MAX_TEMP_DIST
    mem_t = jnp.broadcast_to(jnp.asarray(mem_t)[None, :], (B, Lm))
    can_t = jnp.broadcast_to(jnp.asarray(can_t)[None, :], (B, Lc))

    mem_enc = pe4[mem_xy_i, mem_sz_i, mem_t]
    can_enc = pe4[can_xy_i, can_sz_i, can_t]
    return jnp.concatenate([mem + mem_enc, can + can_enc], axis=1)


# ------------------------------------ main -------------------------------------
if __name__ == "__main__":
    key = jax.random.PRNGKey(0)
    B, Lm, NUM_CAND = 2, 6, 4          # num_candidates includes the [ZERO] candidate
    Lc = NUM_CAND * 2                  # 2 tokens per candidate ([SEP] + [CAN])
    n_can_bb = NUM_CAND - 1            # real candidate bboxes

    k1, k2, k3, k4, k5, k6 = jax.random.split(key, 6)
    mem = jax.random.normal(k1, (B, Lm, D_MODEL), jnp.float32)
    can = jax.random.normal(k2, (B, Lc, D_MODEL), jnp.float32)

    def make_bboxes(ka, kb, lead):
        xy = jax.random.uniform(ka, lead + (2,), minval=0.0, maxval=50.0)
        wh = jax.random.uniform(kb, lead + (2,), minval=5.0, maxval=30.0)
        return jnp.concatenate([xy, xy + wh], axis=-1)   # (.., 4) xmin,ymin,xmax,ymax

    mem_bboxes = make_bboxes(k3, k4, (B, Lm))
    can_bboxes = make_bboxes(k5, k6, (B, n_can_bb))

    table_packed = build_packed_axes_table(D_MODEL)      # (128, 128) gather table
    pe4 = build_pe_table(D_MODEL, R1, R2, R3)            # (R1, R2, R3, D) reference table

    out = positional_encoding_forward(mem, can, mem_bboxes, can_bboxes,
                                      NUM_CAND, table_packed)
    out = jax.block_until_ready(out)

    ref = reference_forward(mem, can, mem_bboxes, can_bboxes, NUM_CAND, pe4)
    assert out.shape == (B, Lm + Lc, D_MODEL)
    np.testing.assert_allclose(np.asarray(out), np.asarray(ref), rtol=1e-5, atol=1e-5)
    print("KERNEL_OK")
</pallas_src>

<mosaic_0001>
module attributes {stable_mosaic.version = 11 : i64} {
  func.func @_pe_kernel(%arg0: i32, %arg1: memref<8x128xf32, #tpu.memory_space<vmem>>, %arg2: memref<8x128xi32, #tpu.memory_space<vmem>>, %arg3: memref<128x128xf32, #tpu.memory_space<vmem>>, %arg4: memref<8x128xf32, #tpu.memory_space<vmem>>) attributes {dimension_semantics = [#tpu.dimension_semantics<parallel>], iteration_bounds = array<i64: 1>, scalar_prefetch = 0 : i64, scratch_operands = 0 : i64, tpu.core_type = #tpu.core_type<tc>, window_params = [{transform_indices = @transform_0, window_bounds = array<i64: 8, 128>}, {transform_indices = @transform_1, window_bounds = array<i64: 8, 128>}, {pipeline_mode = #tpu.pipeline_mode<synchronous>, transform_indices = @transform_2, window_bounds = array<i64: 128, 128>}, {transform_indices = @transform_3, window_bounds = array<i64: 8, 128>}]} {
    %0 = tpu.iota {dimensions = array<i32: 1>} : vector<8x128xi32>
    %c31_i32 = arith.constant 31 : i32
    %1 = vector.broadcast %c31_i32 : i32 to vector<8x128xi32>
    %2 = arith.andi %0, %1 : vector<8x128xi32>
    %c0 = arith.constant 0 : index
    %c0_0 = arith.constant 0 : index
    %3 = vector.load %arg2[%c0, %c0_0] : memref<8x128xi32, #tpu.memory_space<vmem>>, vector<8x128xi32>
    %c63_i32 = arith.constant 63 : i32
    %4 = vector.broadcast %c63_i32 : i32 to vector<8x128xi32>
    %5 = arith.andi %3, %4 : vector<8x128xi32>
    %c6_i32 = arith.constant 6 : i32
    %6 = vector.broadcast %c6_i32 : i32 to vector<8x128xi32>
    %7 = arith.shrsi %3, %6 : vector<8x128xi32>
    %c63_i32_1 = arith.constant 63 : i32
    %8 = vector.broadcast %c63_i32_1 : i32 to vector<8x128xi32>
    %9 = arith.andi %7, %8 : vector<8x128xi32>
    %c12_i32 = arith.constant 12 : i32
    %10 = vector.broadcast %c12_i32 : i32 to vector<8x128xi32>
    %11 = arith.shrsi %3, %10 : vector<8x128xi32>
    %c63_i32_2 = arith.constant 63 : i32
    %12 = vector.broadcast %c63_i32_2 : i32 to vector<8x128xi32>
    %13 = arith.andi %11, %12 : vector<8x128xi32>
    %14 = arith.cmpi eq, %2, %5 : vector<8x128xi32>
    %15 = arith.cmpi eq, %2, %9 : vector<8x128xi32>
    %16 = arith.ori %14, %15 : vector<8x128xi1>
    %17 = arith.cmpi eq, %2, %13 : vector<8x128xi32>
    %18 = arith.ori %16, %17 : vector<8x128xi1>
    %19 = arith.extui %18 : vector<8x128xi1> to vector<8x128xi32>
    %20 = arith.sitofp %19 : vector<8x128xi32> to vector<8x128xf32>
    %c0_3 = arith.constant 0 : index
    %c0_4 = arith.constant 0 : index
    %21 = vector.load %arg3[%c0_3, %c0_4] : memref<128x128xf32, #tpu.memory_space<vmem>>, vector<128x128xf32>
    %cst = arith.constant dense<0.000000e+00> : vector<8x128xf32>
    %22 = tpu.matmul %20, %21, %cst {dimension_numbers = #tpu.dot_dimension_numbers<[1], [0], [0], [1], [0, 0, 1, 1], [], []>} : vector<8x128xf32>, vector<128x128xf32>, vector<8x128xf32> -> vector<8x128xf32>
    %c0_5 = arith.constant 0 : index
    %c0_6 = arith.constant 0 : index
    %23 = vector.load %arg1[%c0_5, %c0_6] : memref<8x128xf32, #tpu.memory_space<vmem>>, vector<8x128xf32>
    %24 = arith.addf %23, %22 : vector<8x128xf32>
    %c0_7 = arith.constant 0 : index
    %c0_8 = arith.constant 0 : index
    %25 = vector.load %arg4[%c0_7, %c0_8] : memref<8x128xf32, #tpu.memory_space<vmem>>, vector<8x128xf32>
    tpu.vector_store %arg4[%c0_7, %c0_8], %24 {strides = array<i32>} : memref<8x128xf32, #tpu.memory_space<vmem>>, vector<8x128xf32>,
    return
  }
  func.func @transform_0(%arg0: i32) -> (i32, i32) {
    %c0_i32 = arith.constant 0 : i32
    %c0_i32_0 = arith.constant 0 : i32
    return %arg0, %c0_i32 : i32, i32
  }
  func.func @transform_1(%arg0: i32) -> (i32, i32) {
    %c0_i32 = arith.constant 0 : i32
    %c0_i32_0 = arith.constant 0 : i32
    return %arg0, %c0_i32 : i32, i32
  }
  func.func @transform_2(%arg0: i32) -> (i32, i32) {
    %c0_i32 = arith.constant 0 : i32
    %c0_i32_0 = arith.constant 0 : i32
    %c0_i32_1 = arith.constant 0 : i32
    return %c0_i32, %c0_i32_0 : i32, i32
  }
  func.func @transform_3(%arg0: i32) -> (i32, i32) {
    %c0_i32 = arith.constant 0 : i32
    %c0_i32_0 = arith.constant 0 : i32
    return %arg0, %c0_i32 : i32, i32
  }
}

</mosaic_0001>

<llo_original>
// kernel: tpu_custom_call.1
$region0: #{tpu_custom_call.1}
  #allocation0 [shape = 'u32[]', space=smem, size = 0x4, offset = 0x4, fixed_abs, tag = 'smem constant byte address 0x4 - core index']
  #allocation1 [shape = 'u32[144,128]{1,0:T(1,128)}', space=vmem, size = 0x12000, scoped, tag = 'internal scratch']
  %s0 = inlined_call_operand.hbm [shape: f32[8,128], index: 0, kind: input, shape index: {}]
  %s1 = inlined_call_operand.hbm [shape: s32[8,128], index: 1, kind: input, shape index: {}]
  %s2 = inlined_call_operand.hbm [shape: f32[128,128], index: 2, kind: input, shape index: {}]
  %s3 = inlined_call_operand.hbm [shape: f32[8,128], index: 3, kind: output, shape index: {}]
  %s4 = sld [smem:[#allocation0]]
  $region34: #{tpu_custom_call.1} parent=0
    _
  %s6 = ssub.s32 1, %s4
  %s7 = scalar_select 0, %s6, %s4
  $region1: #{tpu_custom_call.1} parent=0
    #allocation2 [shape = 'u8[4096]{0}', space=vmem, size = 0x1000, scoped, tag = 'input window, operand 0, single buffered']
    #allocation3 [shape = 's32[1]{0}', space=sflag, size = 0x4, scoped, tag = 'scoped memory for tpu_custom_call.1']
    #allocation4 [shape = 's32[1]{0}', space=sflag, size = 0x4, scoped, tag = 'scoped memory for tpu_custom_call.1']
    #allocation5 [shape = 'u8[4096]{0}', space=vmem, size = 0x1000, scoped, tag = 'input window, operand 1, single buffered']
    #allocation6 [shape = 's32[1]{0}', space=sflag, size = 0x4, scoped, tag = 'scoped memory for tpu_custom_call.1']
    #allocation7 [shape = 'u8[65536]{0}', space=vmem, size = 0x10000, scoped, tag = 'input window, operand 2, single buffered']
    #allocation8 [shape = 'u8[4096]{0}', space=vmem, size = 0x1000, scoped, tag = 'output window, operand 0, single buffered']
    %8 = vsyncpa [#allocation3], 0
    %9 = vsyncpa [#allocation6], 0
    %10 = vsyncpa [#allocation4], 0
    // Predicated region
    $region2: #{tpu_custom_call.1} parent=1 // pred_check
      _
    $region3: #{tpu_custom_call.1} parent=1 // pred_check_branch
      %12 = sbr.rel (0) target = $region5
    $region4: #{tpu_custom_call.1} parent=1 // pred_region
      %s14 = ssub.s32 128, 128
      %15 = vsyncadd [#allocation3], %s14
      %s17 = sshll.u32 [#allocation2], 4
      %s18 = int_to_ptr.vmem [resolvable:$true] %s17
      %20 = dma.hbm_to_vmem [thread:$0]  %s0, 128, %s18, [#allocation3]
    $region5: #{tpu_custom_call.1} parent=1 // pred_fallthru
      _
    // Predicated region
    $region6: #{tpu_custom_call.1} parent=1 // pred_check
      _
    $region7: #{tpu_custom_call.1} parent=1 // pred_check_branch
      %22 = sbr.rel (0) target = $region9
    $region8: #{tpu_custom_call.1} parent=1 // pred_region
      %s24 = ssub.s32 128, 128
      %25 = vsyncadd [#allocation6], %s24
      %s27 = sshll.u32 [#allocation5], 4
      %s28 = int_to_ptr.vmem [resolvable:$true] %s27
      %30 = dma.hbm_to_vmem [thread:$0]  %s1, 128, %s28, [#allocation6]
    $region9: #{tpu_custom_call.1} parent=1 // pred_fallthru
      _
    // Predicated region
    $region10: #{tpu_custom_call.1} parent=1 // pred_check
      _
    $region11: #{tpu_custom_call.1} parent=1 // pred_check_branch
      %32 = sbr.rel (0) target = $region13
    $region12: #{tpu_custom_call.1} parent=1 // pred_region
      %s34 = ssub.s32 2048, 2048
      %35 = vsyncadd [#allocation6], %s34
      %s36 = sshll.u32 [#allocation7], 4
      %s37 = int_to_ptr.vmem [resolvable:$true] %s36
      %42 = dma.hbm_to_vmem [thread:$0]  %s2, 2048, %s37, [#allocation6], 128, 128, 8
    $region13: #{tpu_custom_call.1} parent=1 // pred_fallthru
      _
    // Predicated region
    $region14: #{tpu_custom_call.1} parent=1 // pred_check
      _
    $region15: #{tpu_custom_call.1} parent=1 // pred_check_branch
      %44 = sbr.rel (0) target = $region17
    $region16: #{tpu_custom_call.1} parent=1 // pred_region
      %45 = dma.done [#allocation3], 128
    $region17: #{tpu_custom_call.1} parent=1 // pred_fallthru
      _
    // Predicated region
    $region18: #{tpu_custom_call.1} parent=1 // pred_check
      _
    $region19: #{tpu_custom_call.1} parent=1 // pred_check_branch
      %47 = sbr.rel (0) target = $region21
    $region20: #{tpu_custom_call.1} parent=1 // pred_region
      %48 = dma.done [#allocation6], 128
    $region21: #{tpu_custom_call.1} parent=1 // pred_fallthru
      _
    // Predicated region
    $region22: #{tpu_custom_call.1} parent=1 // pred_check
      _
    $region23: #{tpu_custom_call.1} parent=1 // pred_check_branch
      %50 = sbr.rel (0) target = $region25
    $region24: #{tpu_custom_call.1} parent=1 // pred_region
      %51 = dma.done [#allocation6], 2048
    $region25: #{tpu_custom_call.1} parent=1 // pred_fallthru
      _
    %v52 = vlaneseq
    %v53 = vand.u32 %v52, 127
    %v54 = vand.u32 %v53, 31
    %v55 = vld [vmem:[#allocation5] sm:$0xff]
    %v56 = vand.u32 %v55, 63
    %v57 = vshra.s32 %v55, 6
    %v58 = vand.u32 %v57, 63
    %v59 = vshra.s32 %v55, 12
    %v60 = vand.u32 %v59, 63
    %vm61 = vcmp.eq.s32.totalorder %v54, %v56
    %vm62 = vcmp.eq.s32.totalorder %v54, %v58
    %vm63 = vmor %vm61, %vm62
    %vm64 = vcmp.eq.s32.totalorder %v54, %v60
    %vm65 = vmor %vm63, %vm64
    %v66 = vsel %vm65, 1, 0
    %v67 = vcvt.s32.f32 %v66
    %v68 = vld [vmem:[#allocation7] sm:$0xff]
    %v69 = vld [vmem:[#allocation7 + $0x8] sm:$0xff]
    %v70 = vld [vmem:[#allocation7 + $0x10] sm:$0xff]
    %v71 = vld [vmem:[#allocation7 + $0x18] sm:$0xff]
    %v72 = vld [vmem:[#allocation7 + $0x20] sm:$0xff]
    %v73 = vld [vmem:[#allocation7 + $0x28] sm:$0xff]
    %v74 = vld [vmem:[#allocation7 + $0x30] sm:$0xff]
    %v75 = vld [vmem:[#allocation7 + $0x38] sm:$0xff]
    %v76 = vld [vmem:[#allocation7 + $0x40] sm:$0xff]
    %v77 = vld [vmem:[#allocation7 + $0x48] sm:$0xff]
    %v78 = vld [vmem:[#allocation7 + $0x50] sm:$0xff]
    %v79 = vld [vmem:[#allocation7 + $0x58] sm:$0xff]
    %v80 = vld [vmem:[#allocation7 + $0x60] sm:$0xff]
    %v81 = vld [vmem:[#allocation7 + $0x68] sm:$0xff]
    %v82 = vld [vmem:[#allocation7 + $0x70] sm:$0xff]
    %v83 = vld [vmem:[#allocation7 + $0x78] sm:$0xff]
    %84 = vmatprep.subr.mxu0 0.0
    %85 = vmatpush1.msra.mxu0 %v83
    %86 = vmatprep.subr.mxu0 0.0
    %87 = vmatpush1.msra.mxu0 %v82
    %88 = vmatprep.subr.mxu0 0.0
    %89 = vmatpush1.msra.mxu0 %v81
    %90 = vmatprep.subr.mxu0 0.0
    %91 = vmatpush1.msra.mxu0 %v80
    %92 = vmatprep.subr.mxu0 0.0
    %93 = vmatpush1.msra.mxu0 %v79
    %94 = vmatprep.subr.mxu0 0.0
    %95 = vmatpush1.msra.mxu0 %v78
    %96 = vmatprep.subr.mxu0 0.0
    %97 = vmatpush1.msra.mxu0 %v77
    %98 = vmatprep.subr.mxu0 0.0
    %99 = vmatpush1.msra.mxu0 %v76
    %100 = vmatprep.subr.mxu0 0.0
    %101 = vmatpush1.msra.mxu0 %v75
    %102 = vmatprep.subr.mxu0 0.0
    %103 = vmatpush1.msra.mxu0 %v74
    %104 = vmatprep.subr.mxu0 0.0
    %105 = vmatpush1.msra.mxu0 %v73
    %106 = vmatprep.subr.mxu0 0.0
    %107 = vmatpush1.msra.mxu0 %v72
    %108 = vmatprep.subr.mxu0 0.0
    %109 = vmatpush1.msra.mxu0 %v71
    %110 = vmatprep.subr.mxu0 0.0
    %111 = vmatpush1.msra.mxu0 %v70
    %112 = vmatprep.subr.mxu0 0.0
    %113 = vmatpush1.msra.mxu0 %v69
    %114 = vmatprep.subr.mxu0 0.0
    %115 = vmatpush1.msra.mxu0 %v68
    %116 = vmatprep.subr.mxu0 0.0
    %117 = vmatpush2.msra.mxu0 0.0
    %118 = vmatprep.subr.mxu0 0.0
    %119 = vmatpush2.msra.mxu0 0.0
    %120 = vmatprep.subr.mxu0 0.0
    %121 = vmatpush2.msra.mxu0 0.0
    %122 = vmatprep.subr.mxu0 0.0
    %123 = vmatpush2.msra.mxu0 0.0
    %124 = vmatprep.subr.mxu0 0.0
    %125 = vmatpush2.msra.mxu0 0.0
    %126 = vmatprep.subr.mxu0 0.0
    %127 = vmatpush2.msra.mxu0 0.0
    %128 = vmatprep.subr.mxu0 0.0
    %129 = vmatpush2.msra.mxu0 0.0
    %130 = vmatprep.subr.mxu0 0.0
    %131 = vmatpush2.msra.mxu0 0.0
    %132 = vmatprep.subr.mxu0 0.0
    %133 = vmatpush2.msra.mxu0 0.0
    %134 = vmatprep.subr.mxu0 0.0
    %135 = vmatpush2.msra.mxu0 0.0
    %136 = vmatprep.subr.mxu0 0.0
    %137 = vmatpush2.msra.mxu0 0.0
    %138 = vmatprep.subr.mxu0 0.0
    %139 = vmatpush2.msra.mxu0 0.0
    %140 = vmatprep.subr.mxu0 0.0
    %141 = vmatpush2.msra.mxu0 0.0
    %142 = vmatprep.subr.mxu0 0.0
    %143 = vmatpush2.msra.mxu0 0.0
    %144 = vmatprep.subr.mxu0 0.0
    %145 = vmatpush2.msra.mxu0 0.0
    %146 = vmatprep.subr.mxu0 0.0
    %147 = vmatpush2.msra.mxu0 0.0
    %148 = vmatprep.mubr.f32.mxu0 0.0
    %149 = vmatmul.mubr.f32.gmra.mxu0 %v67
    %v150 = vpop.f32.mrf.mxu0
    %v151 = vadd.f32 0.0, %v150
    %v152 = vpop.f32.mrf.mxu0
    %153 = vdwg.mxu0
    %v154 = vld [vmem:[#allocation2] sm:$0xff]
    %v155 = vadd.f32 %v154, %v151
    %156 = vst [vmem:[#allocation8] sm:$0xff] %v155
    // Predicated region
    $region26: #{tpu_custom_call.1} parent=1 // pred_check
      _
    $region27: #{tpu_custom_call.1} parent=1 // pred_check_branch
      %158 = sbr.rel (0) target = $region29
    $region28: #{tpu_custom_call.1} parent=1 // pred_region
      %s160 = ssub.s32 128, 128
      %161 = vsyncadd [#allocation4], %s160
      %s163 = sshll.u32 [#allocation8], 4
      %s164 = int_to_ptr.vmem [resolvable:$true] %s163
      %166 = dma.vmem_to_hbm [thread:$0]  %s164, 128, %s3, [#allocation4]
    $region29: #{tpu_custom_call.1} parent=1 // pred_fallthru
      _
    // Predicated region
    $region30: #{tpu_custom_call.1} parent=1 // pred_check
      _
    $region31: #{tpu_custom_call.1} parent=1 // pred_check_branch
      %168 = sbr.rel (0) target = $region33
    $region32: #{tpu_custom_call.1} parent=1 // pred_region
      %169 = dma.done [#allocation4], 128
    $region33: #{tpu_custom_call.1} parent=1 // pred_fallthru
      _
    %170 = vsyncpa [#allocation3], 1
    %171 = vsyncpa [#allocation6], 1
    %172 = vsyncpa [#allocation4], 1

</llo_original>
